<compile_context>
chip_gen: v6e
topology: v6e:2x2x1
jax: 0.10.0
libtpu: 0.0.40
codegen_flags: <defaults>
</compile_context>

<pallas_src>
import functools

import numpy as np
import jax
import jax.numpy as jnp
from jax import lax
from jax.experimental import pallas as pl
from jax.experimental.pallas import tpu as pltpu


# ----------------------------- helpers ---------------------------------------

def _pick_tile(dim, target, align):
    """Largest tile <= target that divides dim and is a multiple of `align`;
    falls back to the full dim (which always satisfies the (8,128) rule)."""
    if dim <= target:
        return dim
    t = (target // align) * align
    while t >= align:
        if dim % t == 0:
            return t
        t -= align
    return dim


def _row_align(dtype):
    # bf16 packs 16 sublanes per vreg; use 16-row tiles for bf16, 8 for f32.
    return 16 if jnp.dtype(dtype) == jnp.dtype(jnp.bfloat16) else 8


def _clamp_vmem(nbytes):
    return int(min(max(nbytes, 32 << 20), 128 << 20))


def _isize(dtype):
    return np.dtype(dtype).itemsize


# ----------------------------- linear kernels --------------------------------

def _linear_resident_kernel(x_ref, wT_ref, b_ref, o_ref):
    # Weight is VMEM-resident (constant index_map): one MXU pass per row tile.
    acc = jnp.dot(x_ref[...], wT_ref[...], preferred_element_type=jnp.float32)
    o_ref[...] = (acc + b_ref[...].astype(jnp.float32)).astype(o_ref.dtype)


def _linear_tiled_kernel(x_ref, wT_ref, b_ref, o_ref, acc_ref):
    @pl.when(pl.program_id(2) == 0)
    def _():
        acc_ref[...] = jnp.zeros_like(acc_ref)

    acc_ref[...] += jnp.dot(x_ref[...], wT_ref[...],
                            preferred_element_type=jnp.float32)

    @pl.when(pl.program_id(2) == pl.num_programs(2) - 1)
    def _():
        o_ref[...] = (acc_ref[...] + b_ref[...].astype(jnp.float32)).astype(o_ref.dtype)


def linear(x, wT, b, *, out_dtype, tm=512, tn=256, tk=512,
           resident_weight_max_bytes=12 << 20):
    """y = x @ wT + b.  x: (N, K), wT: (K, M) pre-transposed, b: (1, M) f32."""
    N, K = x.shape
    K2, M = wT.shape
    assert K2 == K and b.shape == (1, M)
    align = _row_align(x.dtype)
    w_bytes = K * M * _isize(wT.dtype)

    if w_bytes <= resident_weight_max_bytes:
        # Projection case (N = B*L >> K): keep the whole weight VMEM-resident
        # (constant index_map -> DMA'd once), tile only the rows.
        btm = _pick_tile(N, tm, align)
        need = (2 * (btm * K * _isize(x.dtype) + btm * M * _isize(out_dtype))
                + 2 * w_bytes + M * 4 + (4 << 20))
        return pl.pallas_call(
            _linear_resident_kernel,
            out_shape=jax.ShapeDtypeStruct((N, M), out_dtype),
            grid=(N // btm,),
            in_specs=[
                pl.BlockSpec((btm, K), lambda i: (i, 0)),
                pl.BlockSpec((K, M), lambda i: (0, 0)),    # resident weight
                pl.BlockSpec((1, M), lambda i: (0, 0)),
            ],
            out_specs=pl.BlockSpec((btm, M), lambda i: (i, 0)),
            compiler_params=pltpu.CompilerParams(
                dimension_semantics=("parallel",),
                vmem_limit_bytes=_clamp_vmem(need)),
        )(x, wT, b)

    # Fallback for weights too large to pin: K/N-tiled, f32 VMEM accumulator.
    btm = _pick_tile(N, tm, align)
    btn = _pick_tile(M, tn, 128)
    btk = _pick_tile(K, tk, 128)
    need = (2 * (btm * btk * _isize(x.dtype) + btk * btn * _isize(wT.dtype)
                 + btm * btn * _isize(out_dtype)) + btm * btn * 4 + (4 << 20))
    return pl.pallas_call(
        _linear_tiled_kernel,
        out_shape=jax.ShapeDtypeStruct((N, M), out_dtype),
        grid=(N // btm, M // btn, K // btk),
        in_specs=[
            pl.BlockSpec((btm, btk), lambda i, j, k: (i, k)),
            pl.BlockSpec((btk, btn), lambda i, j, k: (k, j)),
            pl.BlockSpec((1, btn), lambda i, j, k: (0, j)),
        ],
        out_specs=pl.BlockSpec((btm, btn), lambda i, j, k: (i, j)),
        scratch_shapes=[pltpu.VMEM((btm, btn), jnp.float32)],
        compiler_params=pltpu.CompilerParams(
            dimension_semantics=("parallel", "parallel", "arbitrary"),
            vmem_limit_bytes=_clamp_vmem(need)),
    )(x, wT, b)


# ---------------------------- attention kernel --------------------------------

def _attention_kernel(q_ref, k_ref, v_ref, o_ref, w_ref, *, scale, approx_recip):
    # One (batch, head, q-tile) per grid step.
    q = q_ref[0, 0]                              # (tq, Dh)
    k = k_ref[0, 0]                              # (S,  Dh)
    v = v_ref[0, 0]                              # (S,  Dh)
    # scores = (q @ k^T) * scale; contract last dims of both (no explicit k.T).
    s = lax.dot_general(q, k, (((1,), (1,)), ((), ())),
                        preferred_element_type=jnp.float32) * scale
    m = jnp.max(s, axis=-1, keepdims=True)       # softmax math stays f32 (v5e-safe)
    e = jnp.exp(s - m)
    denom = jnp.sum(e, axis=-1, keepdims=True)
    if approx_recip:
        p = e * pl.reciprocal(denom, approx=True)   # EUP slot; ~free next to exp
    else:
        p = e / denom
    w_ref[0, 0] = p.astype(w_ref.dtype)
    ctx = jnp.dot(p.astype(v.dtype), v, preferred_element_type=jnp.float32)
    o_ref[0, 0] = ctx.astype(o_ref.dtype)


def attention(q, k, v, *, scale, out_dtype, weights_dtype, approx_recip=True,
              tq_target=512):
    """q: (B,H,L,Dh); k,v: (B,H,S,Dh) head-major ->
       (ctx (B,H,L,Dh), probs (H,B,L,S))."""
    B, H, L, Dh = q.shape
    S = k.shape[2]
    assert k.shape == (B, H, S, Dh) and v.shape == (B, H, S, Dh)
    tq = _pick_tile(L, tq_target, _row_align(q.dtype))
    kern = functools.partial(_attention_kernel, scale=scale,
                             approx_recip=approx_recip)
    need = 2 * (tq * Dh * _isize(q.dtype)
                + 2 * S * Dh * _isize(k.dtype)
                + tq * Dh * _isize(out_dtype)
                + tq * S * _isize(weights_dtype)) + (4 << 20)
    return pl.pallas_call(
        kern,
        out_shape=(jax.ShapeDtypeStruct((B, H, L, Dh), out_dtype),
                   jax.ShapeDtypeStruct((H, B, L, S), weights_dtype)),
        grid=(B, H, L // tq),
        in_specs=[
            pl.BlockSpec((1, 1, tq, Dh), lambda b, h, i: (b, h, i, 0)),
            pl.BlockSpec((1, 1, S, Dh), lambda b, h, i: (b, h, 0, 0)),
            pl.BlockSpec((1, 1, S, Dh), lambda b, h, i: (b, h, 0, 0)),
        ],
        out_specs=(
            pl.BlockSpec((1, 1, tq, Dh), lambda b, h, i: (b, h, i, 0)),
            pl.BlockSpec((1, 1, tq, S), lambda b, h, i: (h, b, i, 0)),
        ),
        compiler_params=pltpu.CompilerParams(
            dimension_semantics=("parallel", "parallel", "arbitrary"),
            vmem_limit_bytes=_clamp_vmem(need)),
    )(q, k, v)


# ----------------------------- module wrapper ---------------------------------

class MultiheadAttentionPallas:
    def __init__(self, embed_dim, num_heads, key):
        self.embed_dim = embed_dim
        self.num_heads = num_heads
        self.head_dim = embed_dim // num_heads
        self.scaling = float(self.head_dim ** (-0.5))
        ks = jax.random.split(key, 8)
        init = lambda k, s: (0.02 * jax.random.normal(k, s)).astype(jnp.float32)
        q_w = init(ks[0], (embed_dim, embed_dim)); q_b = init(ks[1], (embed_dim,))
        k_w = init(ks[2], (embed_dim, embed_dim)); k_b = init(ks[3], (embed_dim,))
        v_w = init(ks[4], (embed_dim, embed_dim)); v_b = init(ks[5], (embed_dim,))
        o_w = init(ks[6], (embed_dim, embed_dim)); o_b = init(ks[7], (embed_dim,))
        # Weights stored fused and pre-transposed: x @ [Wq|Wk|Wv]^T in one pass.
        # Column order within each E-wide slab is already head-major (h, d).
        self.qkv_wT = jnp.concatenate([q_w, k_w, v_w], axis=0).T   # (E, 3E)
        self.qkv_b = jnp.concatenate([q_b, k_b, v_b]).reshape(1, 3 * embed_dim)
        self.out_wT = o_w.T                                        # (E, E)
        self.out_b = o_b.reshape(1, embed_dim)

    def _split_heads(self, y, seq_len, bsz):
        # y: (seq_len*bsz, E) rows in (l, b) order -> (B, H, L, Dh) head-major.
        return (y.reshape(seq_len, bsz, self.num_heads, self.head_dim)
                 .transpose(1, 2, 0, 3))

    def __call__(self, query, key, value, compute_dtype=jnp.bfloat16,
                 weights_dtype=jnp.bfloat16, approx_recip=True):
        # query: (tgt_len, bsz, E); key/value: (src_len, bsz, E)
        L, B, E = query.shape
        H, Dh = self.num_heads, self.head_dim
        assert E == self.embed_dim
        S = key.shape[0]
        assert key.shape == (S, B, E) and value.shape == (S, B, E)

        cdt = compute_dtype
        wT = self.qkv_wT.astype(cdt)
        bias = self.qkv_b  # stays f32; added in f32 inside the kernel

        # No (L,B)->(B,L) transpose: projections are row-independent, so run
        # them directly on (l, b)-ordered rows.
        xq = query.reshape(L * B, E).astype(cdt)

        if (key is query) and (value is query):
            # Fused QKV projection: one MXU pass, weight VMEM-resident.
            y = linear(xq, wT, bias, out_dtype=cdt)                # (L*B, 3E)
            # Head-split to (3, B, H, L, Dh) so attention gets lane-aligned,
            # head-major blocks selectable by BlockSpec.
            qkv = y.reshape(L, B, 3, H, Dh).transpose(2, 1, 3, 0, 4)
            q4, k4, v4 = qkv[0], qkv[1], qkv[2]
        else:
            xk = key.reshape(S * B, E).astype(cdt)
            xv = value.reshape(S * B, E).astype(cdt)
            q4 = self._split_heads(
                linear(xq, wT[:, :E], bias[:, :E], out_dtype=cdt), L, B)
            k4 = self._split_heads(
                linear(xk, wT[:, E:2 * E], bias[:, E:2 * E], out_dtype=cdt), S, B)
            v4 = self._split_heads(
                linear(xv, wT[:, 2 * E:], bias[:, 2 * E:], out_dtype=cdt), S, B)

        ctx, attn_weights = attention(
            q4, k4, v4, scale=self.scaling, out_dtype=cdt,
            weights_dtype=weights_dtype, approx_recip=approx_recip)
        # ctx: (B, H, L, Dh) -> rows in (l, b) order, columns head-major (h, d)
        ctx_rows = ctx.transpose(2, 0, 1, 3).reshape(L * B, E)

        out = linear(ctx_rows, self.out_wT.astype(cdt), self.out_b,
                     out_dtype=jnp.float32)                        # (L*B, E) f32
        # Rows are already (l, b)-ordered -> no final transpose needed.
        return out.reshape(L, B, E), attn_weights

    # pure-JAX (f32, torch-faithful) reference for verification
    def reference(self, query, key, value):
        L, B, E = query.shape
        H, Dh = self.num_heads, self.head_dim
        HI = lax.Precision.HIGHEST
        wT, bias = self.qkv_wT, self.qkv_b[0]
        lin = lambda x, w, bb: jnp.dot(x, w, precision=HI) + bb
        q = lin(query.reshape(L * B, E), wT[:, :E], bias[:E]) * self.scaling
        k = lin(key.reshape(L * B, E), wT[:, E:2 * E], bias[E:2 * E])
        v = lin(value.reshape(L * B, E), wT[:, 2 * E:], bias[2 * E:])
        q = q.reshape(L, B * H, Dh).transpose(1, 0, 2)
        k = k.reshape(L, B * H, Dh).transpose(1, 0, 2)
        v = v.reshape(L, B * H, Dh).transpose(1, 0, 2)
        s = jnp.einsum('bld,bsd->bls', q, k, precision=HI)
        p = jax.nn.softmax(s.astype(jnp.float32), axis=-1)
        ctx = jnp.einsum('bls,bsd->bld', p, v, precision=HI)
        ctx = ctx.transpose(1, 0, 2).reshape(L * B, E)
        out = (jnp.dot(ctx, self.out_wT, precision=HI) + self.out_b[0]).reshape(L, B, E)
        w = p.reshape(B, H, L, L).transpose(1, 0, 2, 3)
        return out, w


# --------------------------------- main ---------------------------------------

if __name__ == "__main__":
    # Small shapes: tgt_len=8, bsz=2, embed_dim=32, num_heads=4 (head_dim=8)
    L, B, E, H = 8, 2, 32, 4
    root = jax.random.PRNGKey(0)
    k_mod, k_q = jax.random.split(root, 2)

    mha = MultiheadAttentionPallas(E, H, k_mod)
    query = jax.random.normal(k_q, (L, B, E), dtype=jnp.float32)
    # self-attention: key = value = query (same array)
    ref_attn, ref_w = mha.reference(query, query, query)

    # Fast path: bf16 matmuls (f32 accumulation), bf16 attn_weights, approx recip.
    attn, attn_weights = mha(query, query, query)
    attn = jax.block_until_ready(attn)
    attn_weights = jax.block_until_ready(attn_weights)
    assert attn.shape == (L, B, E)
    assert attn_weights.shape == (H, B, L, L)
    assert jnp.allclose(attn, ref_attn, atol=2e-2, rtol=2e-2)
    assert jnp.allclose(attn_weights.astype(jnp.float32), ref_w, atol=2e-2, rtol=2e-2)

    # Exact path (f32 matmuls, f32 probabilities, exact reciprocal).
    attn32, w32 = mha(query, query, query, compute_dtype=jnp.float32,
                      weights_dtype=jnp.float32, approx_recip=False)
    attn32 = jax.block_until_ready(attn32)
    w32 = jax.block_until_ready(w32)
    assert jnp.allclose(attn32, ref_attn, atol=2e-3, rtol=2e-2)
    assert jnp.allclose(w32, ref_w, atol=2e-3, rtol=2e-2)

    print("KERNEL_OK")
</pallas_src>

<mosaic_0001>
module attributes {stable_mosaic.version = 11 : i64} {
  func.func @_linear_resident_kernel(%arg0: i32, %arg1: memref<16x32xbf16, #tpu.memory_space<vmem>>, %arg2: memref<32x96xbf16, #tpu.memory_space<vmem>>, %arg3: memref<1x96xf32, #tpu.memory_space<vmem>>, %arg4: memref<16x96xbf16, #tpu.memory_space<vmem>>) attributes {dimension_semantics = [#tpu.dimension_semantics<parallel>], iteration_bounds = array<i64: 1>, scalar_prefetch = 0 : i64, scratch_operands = 0 : i64, tpu.core_type = #tpu.core_type<tc>, window_params = [{transform_indices = @transform_0, window_bounds = array<i64: 16, 32>}, {pipeline_mode = #tpu.pipeline_mode<synchronous>, transform_indices = @transform_1, window_bounds = array<i64: 32, 96>}, {pipeline_mode = #tpu.pipeline_mode<synchronous>, transform_indices = @transform_2, window_bounds = array<i64: 1, 96>}, {transform_indices = @transform_3, window_bounds = array<i64: 16, 96>}]} {
    %c0 = arith.constant 0 : index
    %c0_0 = arith.constant 0 : index
    %0 = vector.load %arg1[%c0, %c0_0] : memref<16x32xbf16, #tpu.memory_space<vmem>>, vector<16x32xbf16>
    %c0_1 = arith.constant 0 : index
    %c0_2 = arith.constant 0 : index
    %1 = vector.load %arg2[%c0_1, %c0_2] : memref<32x96xbf16, #tpu.memory_space<vmem>>, vector<32x96xbf16>
    %cst = arith.constant dense<0.000000e+00> : vector<16x96xf32>
    %2 = tpu.matmul %0, %1, %cst {dimension_numbers = #tpu.dot_dimension_numbers<[1], [0], [0], [1], [0, 0, 1, 1], [], []>} : vector<16x32xbf16>, vector<32x96xbf16>, vector<16x96xf32> -> vector<16x96xf32>
    %c0_3 = arith.constant 0 : index
    %c0_4 = arith.constant 0 : index
    %3 = vector.load %arg3[%c0_3, %c0_4] : memref<1x96xf32, #tpu.memory_space<vmem>>, vector<1x96xf32>
    %4 = vector.broadcast %3 : vector<1x96xf32> to vector<16x96xf32>
    %5 = arith.addf %2, %4 : vector<16x96xf32>
    %6 = arith.truncf %5 : vector<16x96xf32> to vector<16x96xbf16>
    %c0_5 = arith.constant 0 : index
    %c0_6 = arith.constant 0 : index
    %7 = vector.load %arg4[%c0_5, %c0_6] : memref<16x96xbf16, #tpu.memory_space<vmem>>, vector<16x96xbf16>
    tpu.vector_store %arg4[%c0_5, %c0_6], %6 {strides = array<i32>} : memref<16x96xbf16, #tpu.memory_space<vmem>>, vector<16x96xbf16>,
    return
  }
  func.func @transform_0(%arg0: i32) -> (i32, i32) {
    %c0_i32 = arith.constant 0 : i32
    %c0_i32_0 = arith.constant 0 : i32
    return %arg0, %c0_i32 : i32, i32
  }
  func.func @transform_1(%arg0: i32) -> (i32, i32) {
    %c0_i32 = arith.constant 0 : i32
    %c0_i32_0 = arith.constant 0 : i32
    %c0_i32_1 = arith.constant 0 : i32
    return %c0_i32, %c0_i32_0 : i32, i32
  }
  func.func @transform_2(%arg0: i32) -> (i32, i32) {
    %c0_i32 = arith.constant 0 : i32
    %c0_i32_0 = arith.constant 0 : i32
    %c0_i32_1 = arith.constant 0 : i32
    return %c0_i32, %c0_i32_0 : i32, i32
  }
  func.func @transform_3(%arg0: i32) -> (i32, i32) {
    %c0_i32 = arith.constant 0 : i32
    %c0_i32_0 = arith.constant 0 : i32
    return %arg0, %c0_i32 : i32, i32
  }
}

</mosaic_0001>

<llo_original>
// kernel: tpu_custom_call.1
$region0: #{tpu_custom_call.1}
  #allocation0 [shape = 'u32[]', space=smem, size = 0x4, offset = 0x4, fixed_abs, tag = 'smem constant byte address 0x4 - core index']
  #allocation1 [shape = 'u32[144,128]{1,0:T(1,128)}', space=vmem, size = 0x12000, scoped, tag = 'internal scratch']
  %s0 = inlined_call_operand.hbm [shape: bf16[16,32], index: 0, kind: input, shape index: {}]
  %s1 = inlined_call_operand.hbm [shape: bf16[32,96], index: 1, kind: input, shape index: {}]
  %s2 = inlined_call_operand.vmem [shape: f32[1,96], index: 2, kind: input, shape index: {}]
  %s3 = inlined_call_operand.hbm [shape: bf16[16,96], index: 3, kind: output, shape index: {}]
  %s4 = sld [smem:[#allocation0]]
  $region30: #{tpu_custom_call.1} parent=0
    _
  %s6 = ssub.s32 1, %s4
  %s7 = scalar_select 0, %s6, %s4
  $region1: #{tpu_custom_call.1} parent=0
    #allocation2 [shape = 'u8[4096]{0}', space=vmem, size = 0x1000, scoped, tag = 'input window, operand 0, single buffered']
    #allocation3 [shape = 's32[1]{0}', space=sflag, size = 0x4, scoped, tag = 'scoped memory for tpu_custom_call.1']
    #allocation4 [shape = 's32[1]{0}', space=sflag, size = 0x4, scoped, tag = 'scoped memory for tpu_custom_call.1']
    #allocation5 [shape = 'u8[8192]{0}', space=vmem, size = 0x2000, scoped, tag = 'input window, operand 1, single buffered']
    #allocation6 [shape = 's32[1]{0}', space=sflag, size = 0x4, scoped, tag = 'scoped memory for tpu_custom_call.1']
    #allocation7 [shape = 'u8[4096]{0}', space=vmem, size = 0x1000, scoped, tag = 'output window, operand 0, single buffered']
    %8 = vsyncpa [#allocation3], 0
    %9 = vsyncpa [#allocation6], 0
    %10 = vsyncpa [#allocation4], 0
    // Predicated region
    $region2: #{tpu_custom_call.1} parent=1 // pred_check
      _
    $region3: #{tpu_custom_call.1} parent=1 // pred_check_branch
      %12 = sbr.rel (0) target = $region5
    $region4: #{tpu_custom_call.1} parent=1 // pred_region
      %s14 = ssub.s32 128, 128
      %15 = vsyncadd [#allocation3], %s14
      %s16 = sshll.u32 [#allocation2], 4
      %s17 = int_to_ptr.vmem [resolvable:$true] %s16
      %22 = dma.hbm_to_vmem [thread:$0]  %s0, 128, %s17, [#allocation3], 64, 64, 4
    $region5: #{tpu_custom_call.1} parent=1 // pred_fallthru
      _
    // Predicated region
    $region6: #{tpu_custom_call.1} parent=1 // pred_check
      _
    $region7: #{tpu_custom_call.1} parent=1 // pred_check_branch
      %24 = sbr.rel (0) target = $region9
    $region8: #{tpu_custom_call.1} parent=1 // pred_region
      %s26 = ssub.s32 256, 256
      %27 = vsyncadd [#allocation6], %s26
      %s28 = sshll.u32 [#allocation5], 4
      %s29 = int_to_ptr.vmem [resolvable:$true] %s28
      %34 = dma.hbm_to_vmem [thread:$0]  %s1, 256, %s29, [#allocation6], 64, 64, 4
    $region9: #{tpu_custom_call.1} parent=1 // pred_fallthru
      _
    // Predicated region
    $region10: #{tpu_custom_call.1} parent=1 // pred_check
      _
    $region11: #{tpu_custom_call.1} parent=1 // pred_check_branch
      %36 = sbr.rel (0) target = $region13
    $region12: #{tpu_custom_call.1} parent=1 // pred_region
      _
    $region13: #{tpu_custom_call.1} parent=1 // pred_fallthru
      _
    // Predicated region
    $region14: #{tpu_custom_call.1} parent=1 // pred_check
      _
    $region15: #{tpu_custom_call.1} parent=1 // pred_check_branch
      %38 = sbr.rel (0) target = $region17
    $region16: #{tpu_custom_call.1} parent=1 // pred_region
      %39 = dma.done [#allocation3], 128
    $region17: #{tpu_custom_call.1} parent=1 // pred_fallthru
      _
    // Predicated region
    $region18: #{tpu_custom_call.1} parent=1 // pred_check
      _
    $region19: #{tpu_custom_call.1} parent=1 // pred_check_branch
      %41 = sbr.rel (0) target = $region21
    $region20: #{tpu_custom_call.1} parent=1 // pred_region
      %42 = dma.done [#allocation6], 256
    $region21: #{tpu_custom_call.1} parent=1 // pred_fallthru
      _
    %v44 = vld [vmem:[#allocation2] sm:$0xf]
    %v45 = vld [vmem:[#allocation2 + $0x4] sm:$0xf]
    %v46 = vld [vmem:[#allocation5] sm:$0xf]
    %v47 = vld [vmem:[#allocation5 + $0x4] sm:$0xf]
    %v48 = vld [vmem:[#allocation5 + $0x8] sm:$0xf]
    %v49 = vld [vmem:[#allocation5 + $0xc] sm:$0xf]
    %v50 = vld [vmem:[%s2] sm:$0x1]
    %v52 = vlaneseq
    %v53 = vshrl.u32 %v52, 7
    %v54 = vsub.s32 0, %v53
    %v55 = vrot.slane %v50, %v54
    %v59 = vunpack.c.l.b16 %v44
    %v60 = vunpack.c.l.b16 %v45
    %v61 = vpack.c.b16 %v60, %v59
    %v66 = vunpack.c.l.b16 %v46
    %v67 = vunpack.c.l.b16 %v47
    %v68 = vunpack.c.l.b16 %v48
    %v69 = vunpack.c.l.b16 %v49
    %v70 = vpack.c.b16 %v67, %v66
    %v71 = vpack.c.b16 %v69, %v68
    %vm74 = vcmask 261120
    %v76 = vsel %vm74, %v61, 0
    %78 = vmatprep.subr.bf16.mxu0 0
    %79 = vmatpush1.bf16.msra.mxu0 0
    %80 = vmatprep.subr.bf16.mxu0 0
    %81 = vmatpush1.bf16.msra.mxu0 0
    %82 = vmatprep.subr.bf16.mxu0 0
    %83 = vmatpush1.bf16.msra.mxu0 0
    %84 = vmatprep.subr.bf16.mxu0 0
    %85 = vmatpush1.bf16.msra.mxu0 0
    %86 = vmatprep.subr.bf16.mxu0 0
    %87 = vmatpush1.bf16.msra.mxu0 0
    %88 = vmatprep.subr.bf16.mxu0 0
    %89 = vmatpush1.bf16.msra.mxu0 0
    %90 = vmatprep.subr.bf16.mxu0 0
    %91 = vmatpush1.bf16.msra.mxu0 %v71
    %92 = vmatprep.subr.bf16.mxu0 0
    %93 = vmatpush1.bf16.msra.mxu0 %v70
    %94 = vmatprep.subr.bf16.mxu0 0
    %95 = vmatpush2.bf16.msra.mxu0 0
    %96 = vmatprep.subr.bf16.mxu0 0
    %97 = vmatpush2.bf16.msra.mxu0 0
    %98 = vmatprep.subr.bf16.mxu0 0
    %99 = vmatpush2.bf16.msra.mxu0 0
    %100 = vmatprep.subr.bf16.mxu0 0
    %101 = vmatpush2.bf16.msra.mxu0 0
    %102 = vmatprep.subr.bf16.mxu0 0
    %103 = vmatpush2.bf16.msra.mxu0 0
    %104 = vmatprep.subr.bf16.mxu0 0
    %105 = vmatpush2.bf16.msra.mxu0 0
    %106 = vmatprep.subr.bf16.mxu0 0
    %107 = vmatpush2.bf16.msra.mxu0 0
    %108 = vmatprep.subr.bf16.mxu0 0
    %109 = vmatpush2.bf16.msra.mxu0 0
    %110 = vmatprep.mubr.bf16.mxu0 0
    %111 = vmatmul.mubr.bf16.gmra.mxu0 %v76
    %v112 = vpop.f32.mrf.mxu0
    %v113 = vadd.f32 %v55, %v112
    %v114 = vpop.f32.mrf.mxu0
    %v115 = vpop.f32.mrf.mxu0
    %v116 = vadd.f32 %v55, %v115
    %v117 = vpop.f32.mrf.mxu0
    %118 = vdwg.mxu0
    %v119 = vpack.c.bf16 %v116, %v113
    %v121 = vunpack.c.l.b16 %v119
    %v122 = vunpack.c.h.b16 %v119
    %v123 = vpack.c.b16 %v121, %v121
    %v124 = vpack.c.b16 %v122, %v122
    %vm127 = vcmask 781312
    %128 = vst.msk [vmem:[#allocation7] sm:$0xf] %vm127, %v123
    %129 = vst.msk [vmem:[#allocation7 + $0x4] sm:$0xf] %vm127, %v124
    // Predicated region
    $region22: #{tpu_custom_call.1} parent=1 // pred_check
      _
    $region23: #{tpu_custom_call.1} parent=1 // pred_check_branch
      %131 = sbr.rel (0) target = $region25
    $region24: #{tpu_custom_call.1} parent=1 // pred_region
      %s133 = ssub.s32 128, 128
      %134 = vsyncadd [#allocation4], %s133
      %s135 = sshll.u32 [#allocation7], 4
      %s136 = int_to_ptr.vmem [resolvable:$true] %s135
      %141 = dma.vmem_to_hbm [thread:$0]  %s136, 128, %s3, [#allocation4], 64, 64, 4
    $region25: #{tpu_custom_call.1} parent=1 // pred_fallthru
      _
    // Predicated region
    $region26: #{tpu_custom_call.1} parent=1 // pred_check
      _
    $region27: #{tpu_custom_call.1} parent=1 // pred_check_branch
      %143 = sbr.rel (0) target = $region29
    $region28: #{tpu_custom_call.1} parent=1 // pred_region
      %144 = dma.done [#allocation4], 128
    $region29: #{tpu_custom_call.1} parent=1 // pred_fallthru
      _
    %145 = vsyncpa [#allocation3], 1
    %146 = vsyncpa [#allocation6], 1
    %147 = vsyncpa [#allocation4], 1

</llo_original>
